<compile_context>
chip_gen: v7x
topology: tpu7x:2x2x1
jax: 0.10.0
libtpu: 0.0.40
codegen_flags: <defaults>
</compile_context>

<pallas_src>
import math

import jax
import jax.numpy as jnp
from jax.experimental import pallas as pl
from jax.experimental.pallas import tpu as pltpu

F32_EPS = float(jnp.finfo(jnp.float32).eps)  # == torch.finfo().eps for float32


def _round_up(n, m):
    return ((n + m - 1) // m) * m


def _softplus(x):
    # Stable softplus; equals torch.nn.Softplus(beta=1, threshold=20) within f32.
    return jnp.maximum(x, 0.0) + jnp.log1p(jnp.exp(-jnp.abs(x)))


def make_kernel(in_dim, h_dim, out_dim):
    def kernel(p_ref, x_ref, out_ref):
        # x tile arrives [TB, in_dim]; transpose in-kernel (XLU, otherwise idle)
        # so the batch axis maps to the 128-wide lane dimension for all compute.
        xT = x_ref[...].T                                   # [in_dim, TB]
        tb = xT.shape[1]
        ones = jnp.ones((1, tb), jnp.float32)               # bias row

        # Layer 1: Linear(in_dim, h_dim) + ReLU, bias folded into K (in_dim+1).
        w1a = p_ref[0:h_dim, 0:in_dim + 1]                  # [h, in+1] (last col = b1)
        h = jnp.dot(w1a, jnp.concatenate([xT, ones], axis=0),
                    preferred_element_type=jnp.float32)     # [h, TB]
        h = jnp.maximum(h, 0.0)

        # Layer 2: Linear(h_dim, h_dim) + ReLU.
        w2a = p_ref[h_dim:2 * h_dim, 0:h_dim + 1]
        h = jnp.dot(w2a, jnp.concatenate([h, ones], axis=0),
                    preferred_element_type=jnp.float32)     # [h, TB]
        h = jnp.maximum(h, 0.0)

        # Layer 3: Linear(h_dim, out_dim) + Softplus (last-layer activation).
        w3a = p_ref[2 * h_dim:2 * h_dim + out_dim, 0:h_dim + 1]
        y = jnp.dot(w3a, jnp.concatenate([h, ones], axis=0),
                    preferred_element_type=jnp.float32)     # [out, TB]

        rate = jnp.maximum(_softplus(y), F32_EPS)           # clamp(min=eps)
        # Transpose back so the kernel emits [TB, out_dim] directly
        # (no wrapper-side XLA transpose pass over the output).
        out_ref[...] = rate.T.astype(out_ref.dtype)

    return kernel


def pack_params(params, in_dim, h_dim, out_dim, dtype=jnp.float32):
    """Pack (w1,b1,w2,b2,w3,b3) into a single [2h+out (padded to 8), 128] buffer.

    Row block r holds W_layer^T; the bias lives in the column right after the
    weights (column fan_in), so each augmented weight slice [rows, 0:fan_in+1]
    can multiply an activation with an appended ones-row.  One input array =>
    one DMA per pallas_call; 128-wide layout => clean tile-aligned slices.
    """
    assert max(in_dim, h_dim) + 1 <= 128, "feature dims must fit a 128-lane row"
    w1, b1, w2, b2, w3, b3 = params          # w: [fan_in, fan_out], b: [1, fan_out]
    R = 2 * h_dim + out_dim
    p = jnp.zeros((_round_up(R, 8), 128), dtype)
    p = p.at[0:h_dim, 0:in_dim].set(w1.T.astype(dtype))
    p = p.at[0:h_dim, in_dim].set(b1.reshape(-1).astype(dtype))
    p = p.at[h_dim:2 * h_dim, 0:h_dim].set(w2.T.astype(dtype))
    p = p.at[h_dim:2 * h_dim, h_dim].set(b2.reshape(-1).astype(dtype))
    p = p.at[2 * h_dim:2 * h_dim + out_dim, 0:h_dim].set(w3.T.astype(dtype))
    p = p.at[2 * h_dim:2 * h_dim + out_dim, h_dim].set(b3.reshape(-1).astype(dtype))
    return p


def vb_exponential_nn_forward(x, packed, in_dim, h_dim, out_dim, *, block_b=4096):
    """MLP + softplus + clamp on TPU via Pallas.

    Accepts x of shape [*lead, in_dim]; returns the Exponential rate of shape
    [*lead, out_dim] (leading dims are flattened for the kernel and restored).
    """
    x = jnp.asarray(x, jnp.float32)
    assert x.shape[-1] == in_dim
    lead = x.shape[:-1]
    x2 = x.reshape(-1, in_dim)
    B = x2.shape[0]

    # Batch-tile selection: fat tiles amortize the ~0.35us/step grid overhead;
    # for large B keep >= 2 grid steps so the "parallel" axis feeds both of
    # v7x's TensorCores (harmless on single-TC v5e/v6e).  Partial last blocks
    # are handled by Pallas masking, so no wrapper-side padding of x.
    block_b = max(128, _round_up(block_b, 128))
    if B <= 256:
        TB = B                                   # single small block (= full dim)
    else:
        TB = min(block_b, max(128, _round_up((B + 1) // 2, 128)))
    grid = (pl.cdiv(B, TB),)

    R_pad, PW = packed.shape
    param_bytes = R_pad * PW * 4
    # Honest VMEM estimate: double-buffered x/out tiles + params + activations,
    # with margin.  Stays far under v7x's 64 MiB physical / 32 MiB scoped VMEM.
    tile_bytes = 4 * TB * (2 * in_dim + 2 * out_dim
                           + (in_dim + 1) + 2 * (h_dim + 1) + out_dim)
    vmem_limit = int(min(64 * 1024 * 1024,
                         max(8 * 1024 * 1024, 2 * (tile_bytes + 2 * param_bytes))))

    kernel = make_kernel(in_dim, h_dim, out_dim)
    rate = pl.pallas_call(
        kernel,
        out_shape=jax.ShapeDtypeStruct((B, out_dim), jnp.float32),
        grid=grid,
        in_specs=[
            # packed params: same block every step -> VMEM-resident weights
            pl.BlockSpec((R_pad, PW), lambda i: (0, 0)),
            # x tile streamed as-is; transposed inside the kernel
            pl.BlockSpec((TB, in_dim), lambda i: (i, 0)),
        ],
        out_specs=pl.BlockSpec((TB, out_dim), lambda i: (i, 0)),
        compiler_params=pltpu.CompilerParams(
            dimension_semantics=("parallel",),   # shard grid steps across v7x's 2 TCs
            vmem_limit_bytes=vmem_limit,
        ),
    )(packed, x2)

    # TODO(synk): torch.distributions.Exponential / TransformedDistribution object
    # construction has no Pallas equivalent; we return its `rate` parameter instead.
    return rate.reshape(*lead, out_dim)


def init_linear_params(key, fan_in, fan_out, dtype=jnp.float32):
    """Deterministic analogue of torch.nn.Linear default init: U(-1/sqrt(fan_in), +)."""
    k_w, k_b = jax.random.split(key)
    bound = 1.0 / math.sqrt(fan_in)
    w = jax.random.uniform(k_w, (fan_in, fan_out), dtype, minval=-bound, maxval=bound)
    b = jax.random.uniform(k_b, (1, fan_out), dtype, minval=-bound, maxval=bound)
    return w, b


def ref_forward(x, params):
    w1, b1, w2, b2, w3, b3 = params
    h = jnp.maximum(x @ w1 + b1, 0.0)
    h = jnp.maximum(h @ w2 + b2, 0.0)
    y = h @ w3 + b3
    return jnp.maximum(_softplus(y), F32_EPS)


if __name__ == "__main__":
    # Module hyper-params (small, consistent with the module defaults).
    in_shape = [8, 16]       # -> in_dim = 16
    out_shape = [8, 16]      # -> out_dim = 16
    h_dim = 32
    nb_layers = 3            # Linear(16,32)+ReLU, Linear(32,32)+ReLU, Linear(32,16)+Softplus
    init_params = [10.0]
    nb_params = 1

    in_dim = in_shape[-1]
    out_dim = out_shape[-1]
    dtype = jnp.float32

    # self.input = init_parameters([10.0], 1, in_shape): constant parameter [*in_shape, 1]
    input_param = jnp.full(tuple(in_shape) + (nb_params,), init_params[0], dtype=dtype)
    x = input_param[..., 0]  # shape [8, 16]; forward uses self.input[..., 0]

    # Deterministic MLP weights (net_rate) from PRNGKey(0).
    key = jax.random.PRNGKey(0)
    k1, k2, k3 = jax.random.split(key, 3)
    w1, b1 = init_linear_params(k1, in_dim, h_dim, dtype)
    w2, b2 = init_linear_params(k2, h_dim, h_dim, dtype)
    w3, b3 = init_linear_params(k3, h_dim, out_dim, dtype)
    params = (w1, b1, w2, b2, w3, b3)
    packed = pack_params(params, in_dim, h_dim, out_dim, dtype)

    # Module-sized run (leading dims of in_shape, i.e. 8 rows).
    rate = vb_exponential_nn_forward(x, packed, in_dim, h_dim, out_dim)
    rate = jax.block_until_ready(rate)
    ref = ref_forward(x.reshape(-1, in_dim), params).reshape(*x.shape[:-1], out_dim)
    assert rate.shape == tuple(out_shape), (rate.shape, out_shape)
    assert rate.dtype == jnp.float32
    assert bool(jnp.all(rate >= F32_EPS))
    assert bool(jnp.allclose(rate, ref, rtol=1e-4, atol=1e-5)), \
        float(jnp.max(jnp.abs(rate - ref)))

    # Larger batched run: exercises the multi-step "parallel" grid path
    # (2 tiles of 1024 -> both TCs busy on v7x, weights VMEM-resident).
    kb = jax.random.PRNGKey(1)
    x_big = 10.0 + jax.random.normal(kb, (2048, in_dim), dtype)
    rate_big = vb_exponential_nn_forward(x_big, packed, in_dim, h_dim, out_dim)
    rate_big = jax.block_until_ready(rate_big)
    ref_big = ref_forward(x_big, params)
    assert rate_big.shape == (2048, out_dim)
    assert bool(jnp.all(rate_big >= F32_EPS))
    assert bool(jnp.allclose(rate_big, ref_big, rtol=1e-4, atol=1e-5)), \
        float(jnp.max(jnp.abs(rate_big - ref_big)))

    # Non-divisible batch: cdiv grid with a masked partial last block
    # (1000 rows, TB=512 -> 2 steps, no wrapper-side padding pass).
    kc = jax.random.PRNGKey(2)
    x_odd = 10.0 + jax.random.normal(kc, (1000, in_dim), dtype)
    rate_odd = vb_exponential_nn_forward(x_odd, packed, in_dim, h_dim, out_dim)
    rate_odd = jax.block_until_ready(rate_odd)
    ref_odd = ref_forward(x_odd, params)
    assert rate_odd.shape == (1000, out_dim)
    assert bool(jnp.all(rate_odd >= F32_EPS))
    assert bool(jnp.allclose(rate_odd, ref_odd, rtol=1e-4, atol=1e-5)), \
        float(jnp.max(jnp.abs(rate_odd - ref_odd)))

    print("KERNEL_OK")
</pallas_src>

<mosaic_0001>
module attributes {stable_mosaic.version = 11 : i64} {
  func.func @kernel(%arg0: i32, %arg1: memref<80x128xf32, #tpu.memory_space<vmem>>, %arg2: memref<8x16xf32, #tpu.memory_space<vmem>>, %arg3: memref<8x16xf32, #tpu.memory_space<vmem>>) attributes {dimension_semantics = [#tpu.dimension_semantics<parallel>], iteration_bounds = array<i64: 1>, scalar_prefetch = 0 : i64, scratch_operands = 0 : i64, tpu.core_type = #tpu.core_type<tc>, window_params = [{pipeline_mode = #tpu.pipeline_mode<synchronous>, transform_indices = @transform_0, window_bounds = array<i64: 80, 128>}, {transform_indices = @transform_1, window_bounds = array<i64: 8, 16>}, {transform_indices = @transform_2, window_bounds = array<i64: 8, 16>}]} {
    %c0 = arith.constant 0 : index
    %c0_0 = arith.constant 0 : index
    %0 = vector.load %arg2[%c0, %c0_0] : memref<8x16xf32, #tpu.memory_space<vmem>>, vector<8x16xf32>
    %1 = tpu.transpose %0, [1, 0] : vector<8x16xf32> -> vector<16x8xf32>
    %cst = arith.constant 1.000000e+00 : f32
    %2 = vector.broadcast %cst : f32 to vector<1x8xf32>
    %c0_1 = arith.constant 0 : index
    %c0_2 = arith.constant 0 : index
    %3 = vector.load %arg1[%c0_1, %c0_2] : memref<80x128xf32, #tpu.memory_space<vmem>>, vector<32x17xf32>
    %4 = tpu.concatenate %1, %2 in 0 : vector<16x8xf32>, vector<1x8xf32> -> vector<17x8xf32>
    %cst_3 = arith.constant dense<0.000000e+00> : vector<32x8xf32>
    %5 = tpu.matmul %3, %4, %cst_3 {dimension_numbers = #tpu.dot_dimension_numbers<[1], [0], [0], [1], [0, 0, 1, 1], [], []>} : vector<32x17xf32>, vector<17x8xf32>, vector<32x8xf32> -> vector<32x8xf32>
    %cst_4 = arith.constant 0.000000e+00 : f32
    %6 = vector.broadcast %cst_4 : f32 to vector<32x8xf32>
    %7 = arith.maximumf %5, %6 : vector<32x8xf32>
    %c32 = arith.constant 32 : index
    %c0_5 = arith.constant 0 : index
    %8 = vector.load %arg1[%c32, %c0_5] : memref<80x128xf32, #tpu.memory_space<vmem>>, vector<32x33xf32>
    %9 = tpu.concatenate %7, %2 in 0 : vector<32x8xf32>, vector<1x8xf32> -> vector<33x8xf32>
    %cst_6 = arith.constant dense<0.000000e+00> : vector<32x8xf32>
    %10 = tpu.matmul %8, %9, %cst_6 {dimension_numbers = #tpu.dot_dimension_numbers<[1], [0], [0], [1], [0, 0, 1, 1], [], []>} : vector<32x33xf32>, vector<33x8xf32>, vector<32x8xf32> -> vector<32x8xf32>
    %cst_7 = arith.constant 0.000000e+00 : f32
    %11 = vector.broadcast %cst_7 : f32 to vector<32x8xf32>
    %12 = arith.maximumf %10, %11 : vector<32x8xf32>
    %c64 = arith.constant 64 : index
    %c0_8 = arith.constant 0 : index
    %13 = vector.load %arg1[%c64, %c0_8] : memref<80x128xf32, #tpu.memory_space<vmem>>, vector<16x33xf32>
    %14 = tpu.concatenate %12, %2 in 0 : vector<32x8xf32>, vector<1x8xf32> -> vector<33x8xf32>
    %cst_9 = arith.constant dense<0.000000e+00> : vector<16x8xf32>
    %15 = tpu.matmul %13, %14, %cst_9 {dimension_numbers = #tpu.dot_dimension_numbers<[1], [0], [0], [1], [0, 0, 1, 1], [], []>} : vector<16x33xf32>, vector<33x8xf32>, vector<16x8xf32> -> vector<16x8xf32>
    %cst_10 = arith.constant 0.000000e+00 : f32
    %16 = vector.broadcast %cst_10 : f32 to vector<16x8xf32>
    %17 = arith.maximumf %15, %16 : vector<16x8xf32>
    %18 = math.absf %15 : vector<16x8xf32>
    %cst_11 = arith.constant 0.000000e+00 : f32
    %19 = vector.broadcast %cst_11 : f32 to vector<16x8xf32>
    %20 = arith.subf %19, %18 : vector<16x8xf32>
    %21 = math.exp %20 : vector<16x8xf32>
    %22 = math.log1p %21 : vector<16x8xf32>
    %23 = arith.addf %17, %22 : vector<16x8xf32>
    %cst_12 = arith.constant 1.1920929E-7 : f32
    %24 = vector.broadcast %cst_12 : f32 to vector<16x8xf32>
    %25 = arith.maximumf %23, %24 : vector<16x8xf32>
    %26 = tpu.transpose %25, [1, 0] : vector<16x8xf32> -> vector<8x16xf32>
    %c0_13 = arith.constant 0 : index
    %c0_14 = arith.constant 0 : index
    %27 = vector.load %arg3[%c0_13, %c0_14] : memref<8x16xf32, #tpu.memory_space<vmem>>, vector<8x16xf32>
    tpu.vector_store %arg3[%c0_13, %c0_14], %26 {strides = array<i32>} : memref<8x16xf32, #tpu.memory_space<vmem>>, vector<8x16xf32>,
    return
  }
  func.func @transform_0(%arg0: i32) -> (i32, i32) {
    %c0_i32 = arith.constant 0 : i32
    %c0_i32_0 = arith.constant 0 : i32
    %c0_i32_1 = arith.constant 0 : i32
    return %c0_i32, %c0_i32_0 : i32, i32
  }
  func.func @transform_1(%arg0: i32) -> (i32, i32) {
    %c0_i32 = arith.constant 0 : i32
    %c0_i32_0 = arith.constant 0 : i32
    return %arg0, %c0_i32 : i32, i32
  }
  func.func @transform_2(%arg0: i32) -> (i32, i32) {
    %c0_i32 = arith.constant 0 : i32
    %c0_i32_0 = arith.constant 0 : i32
    return %arg0, %c0_i32 : i32, i32
  }
}

</mosaic_0001>

<llo_original>
// kernel: tpu_custom_call.1
$region0: #{tpu_custom_call.1}
  #allocation0 [shape = 'u32[]', space=smem, size = 0x4, offset = 0x4, fixed_abs, tag = 'smem constant byte address 0x4 - core index']
  #allocation1 [shape = 'u32[144,128]{1,0:T(1,128)}', space=vmem, size = 0x12000, scoped, tag = 'internal scratch']
  %s0 = inlined_call_operand.hbm [shape: f32[80,128], index: 0, kind: input, shape index: {}]
  %s1 = inlined_call_operand.hbm [shape: f32[8,16], index: 1, kind: input, shape index: {}]
  %s2 = inlined_call_operand.hbm [shape: f32[8,16], index: 2, kind: output, shape index: {}]
  %s3 = sld [smem:[#allocation0]]
  $region26: #{tpu_custom_call.1} parent=0
    _
  %s5 = ssub.s32 1, %s3
  %s6 = scalar_select 0, %s5, %s3
  $region1: #{tpu_custom_call.1} parent=0
    #allocation2 [shape = 'u8[40960]{0}', space=vmem, size = 0xa000, scoped, tag = 'input window, operand 0, single buffered']
    #allocation3 [shape = 's32[1]{0}', space=sflag, size = 0x4, scoped, tag = 'scoped memory for tpu_custom_call.1']
    #allocation4 [shape = 's32[1]{0}', space=sflag, size = 0x4, scoped, tag = 'scoped memory for tpu_custom_call.1']
    #allocation5 [shape = 'u8[4096]{0}', space=vmem, size = 0x1000, scoped, tag = 'input window, operand 1, single buffered']
    #allocation6 [shape = 's32[1]{0}', space=sflag, size = 0x4, scoped, tag = 'scoped memory for tpu_custom_call.1']
    #allocation7 [shape = 'u8[4096]{0}', space=vmem, size = 0x1000, scoped, tag = 'output window, operand 0, single buffered']
    %7 = vsyncpa [#allocation3], 0
    %8 = vsyncpa [#allocation6], 0
    %9 = vsyncpa [#allocation4], 0
    // Predicated region
    $region2: #{tpu_custom_call.1} parent=1 // pred_check
      _
    $region3: #{tpu_custom_call.1} parent=1 // pred_check_branch
      %11 = sbr.rel (0) target = $region5
    $region4: #{tpu_custom_call.1} parent=1 // pred_region
      %s13 = ssub.s32 1280, 1280
      %14 = vsyncadd [#allocation3], %s13
      %s15 = sshll.u32 [#allocation2], 4
      %s16 = int_to_ptr.vmem [resolvable:$true] %s15
      %21 = dma.hbm_to_vmem [thread:$0]  %s0, 1280, %s16, [#allocation3], 128, 128, 8
    $region5: #{tpu_custom_call.1} parent=1 // pred_fallthru
      _
    // Predicated region
    $region6: #{tpu_custom_call.1} parent=1 // pred_check
      _
    $region7: #{tpu_custom_call.1} parent=1 // pred_check_branch
      %23 = sbr.rel (0) target = $region9
    $region8: #{tpu_custom_call.1} parent=1 // pred_region
      %s25 = ssub.s32 128, 128
      %26 = vsyncadd [#allocation6], %s25
      %s28 = sshll.u32 [#allocation5], 4
      %s29 = int_to_ptr.vmem [resolvable:$true] %s28
      %31 = dma.hbm_to_vmem [thread:$0]  %s1, 128, %s29, [#allocation6]
    $region9: #{tpu_custom_call.1} parent=1 // pred_fallthru
      _
    // Predicated region
    $region10: #{tpu_custom_call.1} parent=1 // pred_check
      _
    $region11: #{tpu_custom_call.1} parent=1 // pred_check_branch
      %33 = sbr.rel (0) target = $region13
    $region12: #{tpu_custom_call.1} parent=1 // pred_region
      %34 = dma.done [#allocation3], 1280
    $region13: #{tpu_custom_call.1} parent=1 // pred_fallthru
      _
    // Predicated region
    $region14: #{tpu_custom_call.1} parent=1 // pred_check
      _
    $region15: #{tpu_custom_call.1} parent=1 // pred_check_branch
      %36 = sbr.rel (0) target = $region17
    $region16: #{tpu_custom_call.1} parent=1 // pred_region
      %37 = dma.done [#allocation6], 128
    $region17: #{tpu_custom_call.1} parent=1 // pred_fallthru
      _
    %v38 = vld [vmem:[#allocation5] sm:$0xff]
    %39 = vxpose.xlu0.b32.start [1/16] %v38, 128
    %40 = vxpose.xlu0.b32.cont [2/16] 0.0, 128
    %41 = vxpose.xlu0.b32.cont [3/16] 0.0, 128
    %42 = vxpose.xlu0.b32.cont [4/16] 0.0, 128
    %43 = vxpose.xlu0.b32.cont [5/16] 0.0, 128
    %44 = vxpose.xlu0.b32.cont [6/16] 0.0, 128
    %45 = vxpose.xlu0.b32.cont [7/16] 0.0, 128
    %46 = vxpose.xlu0.b32.cont [8/16] 0.0, 128
    %47 = vxpose.xlu0.b32.cont [9/16] 0.0, 128
    %48 = vxpose.xlu0.b32.cont [10/16] 0.0, 128
    %49 = vxpose.xlu0.b32.cont [11/16] 0.0, 128
    %50 = vxpose.xlu0.b32.cont [12/16] 0.0, 128
    %51 = vxpose.xlu0.b32.cont [13/16] 0.0, 128
    %52 = vxpose.xlu0.b32.cont [14/16] 0.0, 128
    %53 = vxpose.xlu0.b32.cont [15/16] 0.0, 128
    %54 = vxpose.xlu0.b32.end [16/16] 0.0, 128
    %v55 = vpop.trf.xlu0
    %v56 = vpop.trf.xlu0
    %v57 = vpop.trf.xlu0
    %v58 = vpop.trf.xlu0
    %v59 = vpop.trf.xlu0
    %v60 = vpop.trf.xlu0
    %v61 = vpop.trf.xlu0
    %v62 = vpop.trf.xlu0
    %v63 = vpop.trf.xlu0
    %v64 = vpop.trf.xlu0
    %v65 = vpop.trf.xlu0
    %v66 = vpop.trf.xlu0
    %v67 = vpop.trf.xlu0
    %v68 = vpop.trf.xlu0
    %v69 = vpop.trf.xlu0
    %v70 = vpop.trf.xlu0
    %v71 = vld [vmem:[#allocation2] sm:$0xff]
    %v72 = vld [vmem:[#allocation2 + $0x8] sm:$0xff]
    %v73 = vld [vmem:[#allocation2 + $0x10] sm:$0xff]
    %v74 = vld [vmem:[#allocation2 + $0x18] sm:$0xff]
    %vm75 = vcmask 138240
    %v77 = vsel %vm75, %v71, 0
    %v80 = vsel %vm75, %v72, 0
    %v83 = vsel %vm75, %v73, 0
    %v86 = vsel %vm75, %v74, 0
    %vm88 = vcmask 1040384
    %v90 = vsel %vm88, 1.0, 0
    %92 = vmatprep.subr.mxu0 0.0
    %93 = vmatpush1.msra.mxu0 %v55
    %94 = vmatprep.subr.mxu0 0.0
    %95 = vmatpush1.msra.mxu0 %v56
    %96 = vmatprep.subr.mxu0 0.0
    %97 = vmatpush1.msra.mxu0 %v90
    %98 = vmatprep.subr.mxu0 0.0
    %99 = vmatpush1.msra.mxu0 0.0
    %100 = vmatprep.subr.mxu0 0.0
    %101 = vmatpush1.msra.mxu0 0.0
    %102 = vmatprep.subr.mxu0 0.0
    %103 = vmatpush1.msra.mxu0 0.0
    %104 = vmatprep.subr.mxu0 0.0
    %105 = vmatpush1.msra.mxu0 0.0
    %106 = vmatprep.subr.mxu0 0.0
    %107 = vmatpush1.msra.mxu0 0.0
    %108 = vmatprep.subr.mxu0 0.0
    %109 = vmatpush1.msra.mxu0 0.0
    %110 = vmatprep.subr.mxu0 0.0
    %111 = vmatpush1.msra.mxu0 0.0
    %112 = vmatprep.subr.mxu0 0.0
    %113 = vmatpush1.msra.mxu0 0.0
    %114 = vmatprep.subr.mxu0 0.0
    %115 = vmatpush1.msra.mxu0 0.0
    %116 = vmatprep.subr.mxu0 0.0
    %117 = vmatpush1.msra.mxu0 0.0
    %118 = vmatprep.subr.mxu0 0.0
    %119 = vmatpush1.msra.mxu0 0.0
    %120 = vmatprep.subr.mxu0 0.0
    %121 = vmatpush1.msra.mxu0 0.0
    %122 = vmatprep.subr.mxu0 0.0
    %123 = vmatpush1.msra.mxu0 0.0
    %124 = vmatprep.subr.mxu0 0.0
    %125 = vmatpush1.msra.mxu0 0.0
    %126 = vmatprep.subr.mxu0 0.0
    %127 = vmatpush1.msra.mxu0 0.0
    %128 = vmatprep.subr.mxu0 0.0
    %129 = vmatpush1.msra.mxu0 0.0
    %130 = vmatprep.subr.mxu0 0.0
    %131 = vmatpush1.msra.mxu0 0.0
    %132 = vmatprep.subr.mxu0 0.0
    %133 = vmatpush1.msra.mxu0 0.0
    %134 = vmatprep.subr.mxu0 0.0
    %135 = vmatpush1.msra.mxu0 0.0
    %136 = vmatprep.subr.mxu0 0.0
    %137 = vmatpush1.msra.mxu0 0.0
    %138 = vmatprep.subr.mxu0 0.0
    %139 = vmatpush1.msra.mxu0 0.0
    %140 = vmatprep.subr.mxu0 0.0
    %141 = vmatpush1.msra.mxu0 0.0
    %142 = vmatprep.subr.mxu0 0.0
    %143 = vmatpush1.msra.mxu0 0.0
    %144 = vmatprep.subr.mxu0 0.0
    %145 = vmatpush1.msra.mxu0 0.0
    %146 = vmatprep.subr.mxu0 0.0
    %147 = vmatpush1.msra.mxu0 0.0
    %148 = vmatprep.subr.mxu0 0.0
    %149 = vmatpush1.msra.mxu0 0.0
    %150 = vmatprep.subr.mxu0 0.0
    %151 = vmatpush1.msra.mxu0 0.0
    %152 = vmatprep.subr.mxu0 0.0
    %153 = vmatpush1.msra.mxu0 0.0
    %154 = vmatprep.subr.mxu0 0.0
    %155 = vmatpush1.msra.mxu0 0.0
    %156 = vmatprep.mubr.f32.mxu0 0.0
    %157 = vmatmul.mubr.f32.gmra.mrb[0].mxu0 %v77
    %v158 = vpop.f32.mrb[0].mxu0
    %v159 = vadd.f32 0.0, %v158
    %v160 = vpop.f32.mrb[0].mxu0
    %161 = vmatprep.mubr.f32.mxu0 0.0
    %162 = vmatmul.mubr.f32.gmra.mrb[0].mxu0 %v80
    %v163 = vpop.f32.mrb[0].mxu0
    %v164 = vadd.f32 0.0, %v163
    %v165 = vpop.f32.mrb[0].mxu0
    %166 = vmatprep.mubr.f32.mxu0 0.0
    %167 = vmatmul.mubr.f32.gmra.mrb[0].mxu0 %v83
    %v168 = vpop.f32.mrb[0].mxu0
    %v169 = vadd.f32 0.0, %v168
    %v170 = vpop.f32.mrb[0].mxu0
    %171 = vmatprep.mubr.f32.mxu0 0.0
    %172 = vmatmul.mubr.f32.gmra.mrb[0].mxu0 %v86
    %v173 = vpop.f32.mrb[0].mxu0
    %v174 = vadd.f32 0.0, %v173
    %v175 = vpop.f32.mrb[0].mxu0
    %176 = vdwg.mxu0
    %v177 = vmax.f32 %v159, 0.0
    %v178 = vmax.f32 %v164, 0.0
    %v179 = vmax.f32 %v169, 0.0
    %v180 = vmax.f32 %v174, 0.0
    %v181 = vld [vmem:[#allocation2 + $0x20] sm:$0xff]
    %v182 = vld [vmem:[#allocation2 + $0x28] sm:$0xff]
    %v183 = vld [vmem:[#allocation2 + $0x30] sm:$0xff]
    %v184 = vld [vmem:[#allocation2 + $0x38] sm:$0xff]
    %vm185 = vcmask 269312
    %v187 = vsel %vm185, %v181, 0
    %v190 = vsel %vm185, %v182, 0
    %v193 = vsel %vm185, %v183, 0
    %v196 = vsel %vm185, %v184, 0
    %198 = vmatprep.subr.mxu0 0.0
    %199 = vmatpush1.msra.mxu0 %v177
    %200 = vmatprep.subr.mxu0 0.0
    %201 = vmatpush1.msra.mxu0 %v178
    %202 = vmatprep.subr.mxu0 0.0
    %203 = vmatpush1.msra.mxu0 %v179
    %204 = vmatprep.subr.mxu0 0.0
    %205 = vmatpush1.msra.mxu0 %v180
    %206 = vmatprep.subr.mxu0 0.0
    %207 = vmatpush1.msra.mxu0 %v90
    %208 = vmatprep.subr.mxu0 0.0
    %209 = vmatpush1.msra.mxu0 0.0
    %210 = vmatprep.subr.mxu0 0.0
    %211 = vmatpush1.msra.mxu0 0.0
    %212 = vmatprep.subr.mxu0 0.0
    %213 = vmatpush1.msra.mxu0 0.0
    %214 = vmatprep.subr.mxu0 0.0
    %215 = vmatpush1.msra.mxu0 0.0
    %216 = vmatprep.subr.mxu0 0.0
    %217 = vmatpush1.msra.mxu0 0.0
    %218 = vmatprep.subr.mxu0 0.0
    %219 = vmatpush1.msra.mxu0 0.0
    %220 = vmatprep.subr.mxu0 0.0
    %221 = vmatpush1.msra.mxu0 0.0
    %222 = vmatprep.subr.mxu0 0.0
    %223 = vmatpush1.msra.mxu0 0.0
    %224 = vmatprep.subr.mxu0 0.0
    %225 = vmatpush1.msra.mxu0 0.0
    %226 = vmatprep.subr.mxu0 0.0
    %227 = vmatpush1.msra.mxu0 0.0
    %228 = vmatprep.subr.mxu0 0.0
    %229 = vmatpush1.msra.mxu0 0.0
    %230 = vmatprep.subr.mxu0 0.0
    %231 = vmatpush1.msra.mxu0 0.0
    %232 = vmatprep.subr.mxu0 0.0
    %233 = vmatpush1.msra.mxu0 0.0
    %234 = vmatprep.subr.mxu0 0.0
    %235 = vmatpush1.msra.mxu0 0.0
    %236 = vmatprep.subr.mxu0 0.0
    %237 = vmatpush1.msra.mxu0 0.0
    %238 = vmatprep.subr.mxu0 0.0
    %239 = vmatpush1.msra.mxu0 0.0
    %240 = vmatprep.subr.mxu0 0.0
    %241 = vmatpush1.msra.mxu0 0.0
    %242 = vmatprep.subr.mxu0 0.0
    %243 = vmatpush1.msra.mxu0 0.0
    %244 = vmatprep.subr.mxu0 0.0
    %245 = vmatpush1.msra.mxu0 0.0
    %246 = vmatprep.subr.mxu0 0.0
    %247 = vmatpush1.msra.mxu0 0.0
    %248 = vmatprep.subr.mxu0 0.0
    %249 = vmatpush1.msra.mxu0 0.0
    %250 = vmatprep.subr.mxu0 0.0
    %251 = vmatpush1.msra.mxu0 0.0
    %252 = vmatprep.subr.mxu0 0.0
    %253 = vmatpush1.msra.mxu0 0.0
    %254 = vmatprep.subr.mxu0 0.0
    %255 = vmatpush1.msra.mxu0 0.0
    %256 = vmatprep.subr.mxu0 0.0
    %257 = vmatpush1.msra.mxu0 0.0
    %258 = vmatprep.subr.mxu0 0.0
    %259 = vmatpush1.msra.mxu0 0.0
    %260 = vmatprep.subr.mxu0 0.0
    %261 = vmatpush1.msra.mxu0 0.0
    %262 = vmatprep.mubr.f32.mxu0 0.0
    %263 = vmatmul.mubr.f32.gmra.mrb[0].mxu0 %v187
    %v264 = vpop.f32.mrb[0].mxu0
    %v265 = vadd.f32 0.0, %v264
    %v266 = vpop.f32.mrb[0].mxu0
    %267 = vmatprep.mubr.f32.mxu0 0.0
    %268 = vmatmul.mubr.f32.gmra.mrb[0].mxu0 %v190
    %v269 = vpop.f32.mrb[0].mxu0
    %v270 = vadd.f32 0.0, %v269
    %v271 = vpop.f32.mrb[0].mxu0
    %272 = vmatprep.mubr.f32.mxu0 0.0
    %273 = vmatmul.mubr.f32.gmra.mrb[0].mxu0 %v193
    %v274 = vpop.f32.mrb[0].mxu0
    %v275 = vadd.f32 0.0, %v274
    %v276 = vpop.f32.mrb[0].mxu0
    %277 = vmatprep.mubr.f32.mxu0 0.0
    %278 = vmatmul.mubr.f32.gmra.mrb[0].mxu0 %v196
    %v279 = vpop.f32.mrb[0].mxu0
    %v280 = vadd.f32 0.0, %v279
    %v281 = vpop.f32.mrb[0].mxu0
    %282 = vdwg.mxu0
    %v283 = vmax.f32 %v265, 0.0
    %v284 = vmax.f32 %v270, 0.0
    %v285 = vmax.f32 %v275, 0.0
    %v286 = vmax.f32 %v280, 0.0
    %v287 = vld [vmem:[#allocation2 + $0x40] sm:$0xff]
    %v288 = vld [vmem:[#allocation2 + $0x48] sm:$0xff]
    %v290 = vsel %vm185, %v287, 0
    %v293 = vsel %vm185, %v288, 0
    %295 = vmatprep.subr.mxu0 0.0
    %296 = vmatpush1.msra.mxu0 %v283
    %297 = vmatprep.subr.mxu0 0.0
    %298 = vmatpush1.msra.mxu0 %v284
    %299 = vmatprep.subr.mxu0 0.0
    %300 = vmatpush1.msra.mxu0 %v285
    %301 = vmatprep.subr.mxu0 0.0
    %302 = vmatpush1.msra.mxu0 %v286
    %303 = vmatprep.subr.mxu0 0.0
    %304 = vmatpush1.msra.mxu0 %v90
    %305 = vmatprep.subr.mxu0 0.0
    %306 = vmatpush1.msra.mxu0 0.0
    %307 = vmatprep.subr.mxu0 0.0
    %308 = vmatpush1.msra.mxu0 0.0
    %309 = vmatprep.subr.mxu0 0.0
    %310 = vmatpush1.msra.mxu0 0.0
    %311 = vmatprep.subr.mxu0 0.0
    %312 = vmatpush1.msra.mxu0 0.0
    %313 = vmatprep.subr.mxu0 0.0
    %314 = vmatpush1.msra.mxu0 0.0
    %315 = vmatprep.subr.mxu0 0.0
    %316 = vmatpush1.msra.mxu0 0.0
    %317 = vmatprep.subr.mxu0 0.0
    %318 = vmatpush1.msra.mxu0 0.0
    %319 = vmatprep.subr.mxu0 0.0
    %320 = vmatpush1.msra.mxu0 0.0
    %321 = vmatprep.subr.mxu0 0.0
    %322 = vmatpush1.msra.mxu0 0.0
    %323 = vmatprep.subr.mxu0 0.0
    %324 = vmatpush1.msra.mxu0 0.0
    %325 = vmatprep.subr.mxu0 0.0
    %326 = vmatpush1.msra.mxu0 0.0
    %327 = vmatprep.subr.mxu0 0.0
    %328 = vmatpush1.msra.mxu0 0.0
    %329 = vmatprep.subr.mxu0 0.0
    %330 = vmatpush1.msra.mxu0 0.0
    %331 = vmatprep.subr.mxu0 0.0
    %332 = vmatpush1.msra.mxu0 0.0
    %333 = vmatprep.subr.mxu0 0.0
    %334 = vmatpush1.msra.mxu0 0.0
    %335 = vmatprep.subr.mxu0 0.0
    %336 = vmatpush1.msra.mxu0 0.0
    %337 = vmatprep.subr.mxu0 0.0
    %338 = vmatpush1.msra.mxu0 0.0
    %339 = vmatprep.subr.mxu0 0.0
    %340 = vmatpush1.msra.mxu0 0.0
    %341 = vmatprep.subr.mxu0 0.0
    %342 = vmatpush1.msra.mxu0 0.0
    %343 = vmatprep.subr.mxu0 0.0
    %344 = vmatpush1.msra.mxu0 0.0
    %345 = vmatprep.subr.mxu0 0.0
    %346 = vmatpush1.msra.mxu0 0.0
    %347 = vmatprep.subr.mxu0 0.0
    %348 = vmatpush1.msra.mxu0 0.0
    %349 = vmatprep.subr.mxu0 0.0
    %350 = vmatpush1.msra.mxu0 0.0
    %351 = vmatprep.subr.mxu0 0.0
    %352 = vmatpush1.msra.mxu0 0.0
    %353 = vmatprep.subr.mxu0 0.0
    %354 = vmatpush1.msra.mxu0 0.0
    %355 = vmatprep.subr.mxu0 0.0
    %356 = vmatpush1.msra.mxu0 0.0
    %357 = vmatprep.subr.mxu0 0.0
    %358 = vmatpush1.msra.mxu0 0.0
    %359 = vmatprep.mubr.f32.mxu0 0.0
    %360 = vmatmul.mubr.f32.gmra.mrb[0].mxu0 %v290
    %v361 = vpop.f32.mrb[0].mxu0
    %v362 = vadd.f32 0.0, %v361
    %v363 = vpop.f32.mrb[0].mxu0
    %364 = vmatprep.mubr.f32.mxu0 0.0
    %365 = vmatmul.mubr.f32.gmra.mrb[0].mxu0 %v293
    %v366 = vpop.f32.mrb[0].mxu0
    %v367 = vadd.f32 0.0, %v366
    %v368 = vpop.f32.mrb[0].mxu0
    %369 = vdwg.mxu0
    %v370 = vmax.f32 %v362, 0.0
    %v371 = vmax.f32 %v367, 0.0
    %v372 = vand.u32 2147483647, %v362
    %v373 = vand.u32 2147483647, %v367
    %v374 = vsub.f32 0.0, %v372
    %v375 = vsub.f32 0.0, %v373
    %v376 = vmul.f32 %v374, 1.442695
    %v377 = vpow.pop %v376
    %v378 = vmul.f32 %v375, 1.442695
    %v379 = vpow.pop %v378
    %v380 = vadd.f32 %v377, 1.0
    %v381 = vlog2.pop %v380
    %v382 = vmul.f32 %v381, 0.6931472
    %v383 = vmul.f32 -0.5, %v377
    %v384 = vadd.f32 %v383, 1.0
    %v385 = vmul.f32 %v384, %v377
    %v386 = vand.u32 2147483647, %v377
    %vm387 = vcmp.lt.f32.partialorder %v386, 0.0004427343
    %v388 = vsel %vm387, %v385, %v382
    %v389 = vadd.f32 %v379, 1.0
    %v390 = vlog2.pop %v389
    %v391 = vmul.f32 %v390, 0.6931472
    %v392 = vmul.f32 -0.5, %v379
    %v393 = vadd.f32 %v392, 1.0
    %v394 = vmul.f32 %v393, %v379
    %v395 = vand.u32 2147483647, %v379
    %vm396 = vcmp.lt.f32.partialorder %v395, 0.0004427343
    %v397 = vsel %vm396, %v394, %v391
    %v398 = vadd.f32 %v370, %v388
    %v399 = vadd.f32 %v371, %v397
    %v400 = vmax.f32 %v398, 1.1920929e-07
    %v401 = vmax.f32 %v399, 1.1920929e-07
    %402 = vxpose.xlu0.b32.start [1/16] %v400, 128
    %403 = vxpose.xlu0.b32.cont [2/16] %v401, 128
    %404 = vxpose.xlu0.b32.cont [3/16] 0.0, 128
    %405 = vxpose.xlu0.b32.cont [4/16] 0.0, 128
    %406 = vxpose.xlu0.b32.cont [5/16] 0.0, 128
    %407 = vxpose.xlu0.b32.cont [6/16] 0.0, 128
    %408 = vxpose.xlu0.b32.cont [7/16] 0.0, 128
    %409 = vxpose.xlu0.b32.cont [8/16] 0.0, 128
    %410 = vxpose.xlu0.b32.cont [9/16] 0.0, 128
    %411 = vxpose.xlu0.b32.cont [10/16] 0.0, 128
    %412 = vxpose.xlu0.b32.cont [11/16] 0.0, 128
    %413 = vxpose.xlu0.b32.cont [12/16] 0.0, 128
    %414 = vxpose.xlu0.b32.cont [13/16] 0.0, 128
    %415 = vxpose.xlu0.b32.cont [14/16] 0.0, 128
    %416 = vxpose.xlu0.b32.cont [15/16] 0.0, 128
    %417 = vxpose.xlu0.b32.end [16/16] 0.0, 128
    %v418 = vpop.trf.xlu0
    %v419 = vpop.trf.xlu0
    %v420 = vpop.trf.xlu0
    %v421 = vpop.trf.xlu0
    %v422 = vpop.trf.xlu0
    %v423 = vpop.trf.xlu0
    %v424 = vpop.trf.xlu0
    %v425 = vpop.trf.xlu0
    %v426 = vpop.trf.xlu0
    %v427 = vpop.trf.xlu0
    %v428 = vpop.trf.xlu0
    %v429 = vpop.trf.xlu0
    %v430 = vpop.trf.xlu0
    %v431 = vpop.trf.xlu0
    %v432 = vpop.trf.xlu0
    %v433 = vpop.trf.xlu0
    %vm434 = vcmask 130048
    %435 = vst.msk [vmem:[#allocation7] sm:$0xff] %vm434, %v418
    // Predicated region
    $region18: #{tpu_custom_call.1} parent=1 // pred_check
      _
    $region19: #{tpu_custom_call.1} parent=1 // pred_check_branch
      %437 = sbr.rel (0) target = $region21
    $region20: #{tpu_custom_call.1} parent=1 // pred_region
      %s439 = ssub.s32 128, 128
      %440 = vsyncadd [#allocation4], %s439
      %s442 = sshll.u32 [#allocation7], 4
      %s443 = int_to_ptr.vmem [resolvable:$true] %s442
      %445 = dma.vmem_to_hbm [thread:$0]  %s443, 128, %s2, [#allocation4]
    $region21: #{tpu_custom_call.1} parent=1 // pred_fallthru
      _
    // Predicated region
    $region22: #{tpu_custom_call.1} parent=1 // pred_check
      _
    $region23: #{tpu_custom_call.1} parent=1 // pred_check_branch
      %447 = sbr.rel (0) target = $region25
    $region24: #{tpu_custom_call.1} parent=1 // pred_region
      %448 = dma.done [#allocation4], 128
    $region25: #{tpu_custom_call.1} parent=1 // pred_fallthru
      _
    %449 = vsyncpa [#allocation3], 1
    %450 = vsyncpa [#allocation6], 1
    %451 = vsyncpa [#allocation4], 1

</llo_original>
